<compile_context>
chip_gen: v7x
topology: tpu7x:2x2x1
jax: 0.10.0
libtpu: 0.0.40
codegen_flags: <defaults>
</compile_context>

<pallas_src>
import functools

import jax
import jax.numpy as jnp
import numpy as np
from jax.experimental import pallas as pl
from jax.experimental.pallas import tpu as pltpu


def make_position_encoding(max_len: int, d_model: int) -> jnp.ndarray:
    """Sinusoidal encoding, identical to PositionEmbedding.__init__ (d_model even)."""
    pos = jnp.arange(max_len, dtype=jnp.float32)[:, None]            # (max_len, 1)
    two_i = jnp.arange(0, d_model, 2, dtype=jnp.float32)             # (d_model/2,)
    angle = pos / (10000.0 ** (two_i / d_model))                      # (max_len, d_model/2)
    enc = jnp.zeros((max_len, d_model), jnp.float32)
    enc = enc.at[:, 0::2].set(jnp.sin(angle))
    enc = enc.at[:, 1::2].set(jnp.cos(angle))
    return enc


def _choose_token_block(seq: int, per_token_bytes: int, vmem_budget_bytes: int,
                        target: int = 512) -> int:
    """Largest multiple-of-8 divisor of seq that fits the VMEM budget and <= target.

    tq == seq is always legal (block dim equal to the full array dim), so short
    sequences return seq even when it is not a multiple of 8.
    """
    cap = max(8, int(vmem_budget_bytes // max(per_token_bytes, 1)))
    cap = min(cap, target)
    if seq <= cap:
        return seq
    best = 0
    for tq in range(8, cap + 1, 8):
        if seq % tq == 0:
            best = tq
    if best:
        return best
    # Pathological seq with no multiple-of-8 divisor <= cap: fall back to one block.
    return seq


# ---------------------------------------------------------------------------------
# Fast path: table resident in VMEM, gather via dynamic row slices (no DMAs).
# ---------------------------------------------------------------------------------
def _embed_fast_kernel(ids_ref, table_ref, pos_ref, out_ref, stage_ref, *, seq, tq):
    # ids_ref   : (batch*seq,) int32 in SMEM (scalar prefetch)
    # table_ref : (vocab, d_p) VMEM, resident across all grid steps
    # pos_ref   : (tq, d_p) float32 VMEM tile (resident across inner batch axis)
    # out_ref   : (tq, d_p) VMEM output tile (batch dim squeezed by BlockSpec)
    # stage_ref : (tq, d_p) VMEM staging buffer (table dtype)
    s_blk = pl.program_id(0)
    b = pl.program_id(1)
    base = b * seq + s_blk * tq

    def copy_row(t):
        row = ids_ref[base + t]
        stage_ref[pl.ds(t, 1), :] = table_ref[pl.ds(row, 1), :]

    if tq <= 128:                       # static: fully unroll the row copies
        for t in range(tq):
            copy_row(t)
    else:
        @pl.loop(0, tq)
        def _(t):
            copy_row(t)

    # Single dense vectorized add over the whole block; add in f32 like the PyTorch
    # fp32 position buffer, then cast to the (promoted) output dtype.
    out_ref[...] = (stage_ref[...].astype(jnp.float32) + pos_ref[...]).astype(out_ref.dtype)


# ---------------------------------------------------------------------------------
# Slow path: table in HBM, double-buffered per-row gather DMAs across grid steps.
# ---------------------------------------------------------------------------------
def _embed_gather_kernel(ids_ref, table_hbm, pos_ref, out_ref, stage_ref, sem,
                         *, seq, tq):
    # ids_ref   : (batch*seq,) int32 in SMEM (scalar prefetch)
    # table_hbm : (vocab, d_p) raw HBM ref (memory_space=pl.ANY)
    # pos_ref   : (tq, d_p) float32 VMEM tile
    # out_ref   : (tq, d_p) VMEM output tile
    # stage_ref : (2, tq, d_p) VMEM double-buffered staging for gathered rows
    # sem       : (2,) DMA semaphores, one per staging slot
    s_blk = pl.program_id(0)
    b = pl.program_id(1)
    n_b = pl.num_programs(1)
    step = s_blk * n_b + b
    total = pl.num_programs(0) * n_b
    slot = step % 2

    def issue(src_s, src_b, slot_idx):
        base = src_b * seq + src_s * tq

        def start_row(t):
            row = ids_ref[base + t]
            pltpu.make_async_copy(
                table_hbm.at[pl.ds(row, 1), :],
                stage_ref.at[slot_idx, pl.ds(t, 1), :],
                sem.at[slot_idx],
            ).start()

        if tq <= 128:                   # static: unrolled back-to-back descriptor issue
            for t in range(tq):
                start_row(t)
        else:
            @pl.loop(0, tq)
            def _(t):
                start_row(t)

    def wait(slot_idx):
        # INVARIANT: all tq row copies have identical size (1, d_p) and signal
        # sem[slot_idx]; one aggregate wait whose descriptor covers the whole
        # (tq, d_p) slot consumes exactly the same byte count, replacing tq
        # serialized semaphore waits with a single one.
        pltpu.make_async_copy(
            table_hbm.at[pl.ds(0, tq), :],
            stage_ref.at[slot_idx],
            sem.at[slot_idx],
        ).wait()

    # Prime the pipeline on the very first grid step (slot 0).
    @pl.when(step == 0)
    def _():
        issue(s_blk, b, slot)

    # Prefetch the NEXT grid step's rows into the other slot BEFORE waiting on the
    # current slot (and before any .wait(), so SMEM id reads are not stalled),
    # overlapping its HBM gather with this step's wait/add/writeback.
    nb = b + 1
    wrap = nb == n_b
    b_next = jnp.where(wrap, 0, nb)
    s_next = jnp.where(wrap, s_blk + 1, s_blk)

    @pl.when(step + 1 < total)
    def _():
        issue(s_next, b_next, 1 - slot)

    wait(slot)
    out_ref[...] = (stage_ref[slot].astype(jnp.float32) + pos_ref[...]).astype(out_ref.dtype)


def transformer_embedding(ids: jnp.ndarray,
                          table: jnp.ndarray,
                          pos_enc: jnp.ndarray,
                          *, force_hbm_gather: bool = False) -> jnp.ndarray:
    """ids: (batch, seq) int32; table: (vocab, d_model); pos_enc: (max_len, d_model)."""
    batch, seq = ids.shape
    vocab, d_model = table.shape
    assert pos_enc.shape[0] >= seq, "seq_len exceeds max_len"

    out_dtype = jnp.promote_types(table.dtype, jnp.float32)   # torch: table + fp32 buffer
    out_isz = jnp.dtype(out_dtype).itemsize
    tbl_isz = jnp.dtype(table.dtype).itemsize

    # Lane-pad d_model to a multiple of 128 so rows / output tiles are lane-dense.
    d_p = ((d_model + 127) // 128) * 128
    pos = pos_enc[:seq].astype(jnp.float32)
    if d_p != d_model:
        table_p = jnp.pad(table, ((0, 0), (0, d_p - d_model)))
        pos = jnp.pad(pos, ((0, 0), (0, d_p - d_model)))
    else:
        table_p = table

    table_bytes = vocab * d_p * tbl_isz
    # Fast path when the (padded) table comfortably fits in VMEM alongside the tiles.
    use_fast = (not force_hbm_gather) and table_bytes <= 4 * 1024 * 1024

    # Per-step working-set budget, conservative across v5e/v6e/v7x (v7x: 64 MiB VMEM).
    vmem_budget = 20 * 1024 * 1024
    if use_fast:
        per_tok = d_p * (2 * out_isz + 2 * 4 + tbl_isz)       # 2x out, 2x pos, 1x stage
        tq = _choose_token_block(seq, per_tok, max(vmem_budget - table_bytes, 1 << 20))
    else:
        per_tok = d_p * (2 * out_isz + 2 * 4 + 2 * tbl_isz)   # 2x out, 2x pos, 2x stage
        tq = _choose_token_block(seq, per_tok, vmem_budget)
    n_s = seq // tq

    ids_flat = ids.reshape(batch * seq).astype(jnp.int32)
    # TODO(synk): for very long batch*seq (>~128K tokens), pass ids as a pipelined SMEM
    # BlockSpec input instead of one scalar-prefetch buffer (1D SMEM pads to next_pow2).

    compiler_params = pltpu.CompilerParams(
        # Fast path: grid steps independent -> megacore can shard (v7x 2 TCs).
        # Slow path: cross-step prefetch carries scratch state -> sequential required.
        dimension_semantics=(("parallel", "parallel") if use_fast
                             else ("arbitrary", "arbitrary")),
        # Above v5e's 16 MiB default scoped VMEM, below v7x's 64 MiB physical.
        vmem_limit_bytes=40 * 1024 * 1024,
    )

    if use_fast:
        grid_spec = pltpu.PrefetchScalarGridSpec(
            num_scalar_prefetch=1,                   # ids -> SMEM
            grid=(n_s, batch),                       # batch is the inner (fast) axis
            in_specs=[
                # full table resident in VMEM (block index constant -> DMA'd once)
                pl.BlockSpec((vocab, d_p), lambda s, b, ids_r: (0, 0)),
                # pos tile resident across the inner batch axis
                pl.BlockSpec((tq, d_p), lambda s, b, ids_r: (s, 0)),
            ],
            out_specs=pl.BlockSpec((None, tq, d_p), lambda s, b, ids_r: (b, s, 0)),
            scratch_shapes=[pltpu.VMEM((tq, d_p), table_p.dtype)],
        )
        kernel = functools.partial(_embed_fast_kernel, seq=seq, tq=tq)
    else:
        grid_spec = pltpu.PrefetchScalarGridSpec(
            num_scalar_prefetch=1,
            grid=(n_s, batch),
            in_specs=[
                pl.BlockSpec(memory_space=pl.ANY),   # table stays in HBM; manual gather
                pl.BlockSpec((tq, d_p), lambda s, b, ids_r: (s, 0)),
            ],
            out_specs=pl.BlockSpec((None, tq, d_p), lambda s, b, ids_r: (b, s, 0)),
            scratch_shapes=[
                pltpu.VMEM((2, tq, d_p), table_p.dtype),   # double-buffered staging
                pltpu.SemaphoreType.DMA((2,)),             # one DMA sem per slot
            ],
        )
        kernel = functools.partial(_embed_gather_kernel, seq=seq, tq=tq)

    out = pl.pallas_call(
        kernel,
        grid_spec=grid_spec,
        out_shape=jax.ShapeDtypeStruct((batch, seq, d_p), out_dtype),
        compiler_params=compiler_params,
    )(ids_flat, table_p, pos)

    if d_p != d_model:
        out = out[..., :d_model]
    # Dropout in eval mode == identity.
    return out


if __name__ == "__main__":
    vocab_size = 32
    d_model = 32
    max_len = 16
    batch, seq = 2, 8
    padding_idx = 1

    key = jax.random.PRNGKey(0)
    k_table, k_ids = jax.random.split(key)

    # Deterministic parameter init (nn.Embedding ~ N(0,1), padding row zeroed).
    table = jax.random.normal(k_table, (vocab_size, d_model), dtype=jnp.float32)
    table = table.at[padding_idx, :].set(0.0)

    pos_enc = make_position_encoding(max_len, d_model)
    ids = jax.random.randint(k_ids, (batch, seq), 0, vocab_size, dtype=jnp.int32)

    expected = table[ids] + pos_enc[:seq, :][None, :, :]

    # Fast path (table resident in VMEM).
    out_fast = jax.block_until_ready(transformer_embedding(ids, table, pos_enc))
    np.testing.assert_allclose(np.asarray(out_fast), np.asarray(expected),
                               rtol=1e-6, atol=1e-6)

    # Slow path (double-buffered HBM row-gather DMAs), forced for coverage.
    out_gather = jax.block_until_ready(
        transformer_embedding(ids, table, pos_enc, force_hbm_gather=True))
    np.testing.assert_allclose(np.asarray(out_gather), np.asarray(expected),
                               rtol=1e-6, atol=1e-6)

    print("KERNEL_OK")
</pallas_src>

<mosaic_0001>
module attributes {stable_mosaic.version = 11 : i64} {
  func.func @_embed_fast_kernel(%arg0: i32, %arg1: i32, %arg2: memref<16xi32, #tpu.memory_space<smem>>, %arg3: memref<32x128xf32, #tpu.memory_space<vmem>>, %arg4: memref<8x128xf32, #tpu.memory_space<vmem>>, %arg5: memref<1x8x128xf32, #tpu.memory_space<vmem>>, %arg6: memref<8x128xf32, #tpu.memory_space<vmem>>) attributes {dimension_semantics = [#tpu.dimension_semantics<parallel>, #tpu.dimension_semantics<parallel>], iteration_bounds = array<i64: 1, 2>, scalar_prefetch = 1 : i64, scratch_operands = 1 : i64, tpu.core_type = #tpu.core_type<tc>, window_params = [{pipeline_mode = #tpu.pipeline_mode<synchronous>, transform_indices = @transform_0, window_bounds = array<i64: 32, 128>}, {transform_indices = @transform_1, window_bounds = array<i64: 8, 128>}, {transform_indices = @transform_2, window_bounds = array<i64: 1, 8, 128>}]} {
    %c8_i32 = arith.constant 8 : i32
    %0 = arith.muli %arg1, %c8_i32 : i32
    %c8_i32_0 = arith.constant 8 : i32
    %1 = arith.muli %arg0, %c8_i32_0 : i32
    %2 = arith.addi %0, %1 : i32
    %c0_i32 = arith.constant 0 : i32
    %3 = arith.addi %2, %c0_i32 : i32
    %4 = arith.index_cast %3 : i32 to index
    %5 = memref.load %arg2[%4] : memref<16xi32, #tpu.memory_space<smem>>
    %6 = arith.index_cast %5 : i32 to index
    %c0 = arith.constant 0 : index
    %7 = vector.load %arg3[%6, %c0] : memref<32x128xf32, #tpu.memory_space<vmem>>, vector<1x128xf32>
    %c0_1 = arith.constant 0 : index
    %c0_2 = arith.constant 0 : index
    %8 = vector.load %arg6[%c0_1, %c0_2] : memref<8x128xf32, #tpu.memory_space<vmem>>, vector<1x128xf32>
    tpu.vector_store %arg6[%c0_1, %c0_2], %7 {strides = array<i32>} : memref<8x128xf32, #tpu.memory_space<vmem>>, vector<1x128xf32>,
    %c1_i32 = arith.constant 1 : i32
    %9 = arith.addi %2, %c1_i32 : i32
    %10 = arith.index_cast %9 : i32 to index
    %11 = memref.load %arg2[%10] : memref<16xi32, #tpu.memory_space<smem>>
    %12 = arith.index_cast %11 : i32 to index
    %c0_3 = arith.constant 0 : index
    %13 = vector.load %arg3[%12, %c0_3] : memref<32x128xf32, #tpu.memory_space<vmem>>, vector<1x128xf32>
    %c1 = arith.constant 1 : index
    %c0_4 = arith.constant 0 : index
    %14 = vector.load %arg6[%c1, %c0_4] : memref<8x128xf32, #tpu.memory_space<vmem>>, vector<1x128xf32>
    tpu.vector_store %arg6[%c1, %c0_4], %13 {strides = array<i32>} : memref<8x128xf32, #tpu.memory_space<vmem>>, vector<1x128xf32>,
    %c2_i32 = arith.constant 2 : i32
    %15 = arith.addi %2, %c2_i32 : i32
    %16 = arith.index_cast %15 : i32 to index
    %17 = memref.load %arg2[%16] : memref<16xi32, #tpu.memory_space<smem>>
    %18 = arith.index_cast %17 : i32 to index
    %c0_5 = arith.constant 0 : index
    %19 = vector.load %arg3[%18, %c0_5] : memref<32x128xf32, #tpu.memory_space<vmem>>, vector<1x128xf32>
    %c2 = arith.constant 2 : index
    %c0_6 = arith.constant 0 : index
    %20 = vector.load %arg6[%c2, %c0_6] : memref<8x128xf32, #tpu.memory_space<vmem>>, vector<1x128xf32>
    tpu.vector_store %arg6[%c2, %c0_6], %19 {strides = array<i32>} : memref<8x128xf32, #tpu.memory_space<vmem>>, vector<1x128xf32>,
    %c3_i32 = arith.constant 3 : i32
    %21 = arith.addi %2, %c3_i32 : i32
    %22 = arith.index_cast %21 : i32 to index
    %23 = memref.load %arg2[%22] : memref<16xi32, #tpu.memory_space<smem>>
    %24 = arith.index_cast %23 : i32 to index
    %c0_7 = arith.constant 0 : index
    %25 = vector.load %arg3[%24, %c0_7] : memref<32x128xf32, #tpu.memory_space<vmem>>, vector<1x128xf32>
    %c3 = arith.constant 3 : index
    %c0_8 = arith.constant 0 : index
    %26 = vector.load %arg6[%c3, %c0_8] : memref<8x128xf32, #tpu.memory_space<vmem>>, vector<1x128xf32>
    tpu.vector_store %arg6[%c3, %c0_8], %25 {strides = array<i32>} : memref<8x128xf32, #tpu.memory_space<vmem>>, vector<1x128xf32>,
    %c4_i32 = arith.constant 4 : i32
    %27 = arith.addi %2, %c4_i32 : i32
    %28 = arith.index_cast %27 : i32 to index
    %29 = memref.load %arg2[%28] : memref<16xi32, #tpu.memory_space<smem>>
    %30 = arith.index_cast %29 : i32 to index
    %c0_9 = arith.constant 0 : index
    %31 = vector.load %arg3[%30, %c0_9] : memref<32x128xf32, #tpu.memory_space<vmem>>, vector<1x128xf32>
    %c4 = arith.constant 4 : index
    %c0_10 = arith.constant 0 : index
    %32 = vector.load %arg6[%c4, %c0_10] : memref<8x128xf32, #tpu.memory_space<vmem>>, vector<1x128xf32>
    tpu.vector_store %arg6[%c4, %c0_10], %31 {strides = array<i32>} : memref<8x128xf32, #tpu.memory_space<vmem>>, vector<1x128xf32>,
    %c5_i32 = arith.constant 5 : i32
    %33 = arith.addi %2, %c5_i32 : i32
    %34 = arith.index_cast %33 : i32 to index
    %35 = memref.load %arg2[%34] : memref<16xi32, #tpu.memory_space<smem>>
    %36 = arith.index_cast %35 : i32 to index
    %c0_11 = arith.constant 0 : index
    %37 = vector.load %arg3[%36, %c0_11] : memref<32x128xf32, #tpu.memory_space<vmem>>, vector<1x128xf32>
    %c5 = arith.constant 5 : index
    %c0_12 = arith.constant 0 : index
    %38 = vector.load %arg6[%c5, %c0_12] : memref<8x128xf32, #tpu.memory_space<vmem>>, vector<1x128xf32>
    tpu.vector_store %arg6[%c5, %c0_12], %37 {strides = array<i32>} : memref<8x128xf32, #tpu.memory_space<vmem>>, vector<1x128xf32>,
    %c6_i32 = arith.constant 6 : i32
    %39 = arith.addi %2, %c6_i32 : i32
    %40 = arith.index_cast %39 : i32 to index
    %41 = memref.load %arg2[%40] : memref<16xi32, #tpu.memory_space<smem>>
    %42 = arith.index_cast %41 : i32 to index
    %c0_13 = arith.constant 0 : index
    %43 = vector.load %arg3[%42, %c0_13] : memref<32x128xf32, #tpu.memory_space<vmem>>, vector<1x128xf32>
    %c6 = arith.constant 6 : index
    %c0_14 = arith.constant 0 : index
    %44 = vector.load %arg6[%c6, %c0_14] : memref<8x128xf32, #tpu.memory_space<vmem>>, vector<1x128xf32>
    tpu.vector_store %arg6[%c6, %c0_14], %43 {strides = array<i32>} : memref<8x128xf32, #tpu.memory_space<vmem>>, vector<1x128xf32>,
    %c7_i32 = arith.constant 7 : i32
    %45 = arith.addi %2, %c7_i32 : i32
    %46 = arith.index_cast %45 : i32 to index
    %47 = memref.load %arg2[%46] : memref<16xi32, #tpu.memory_space<smem>>
    %48 = arith.index_cast %47 : i32 to index
    %c0_15 = arith.constant 0 : index
    %49 = vector.load %arg3[%48, %c0_15] : memref<32x128xf32, #tpu.memory_space<vmem>>, vector<1x128xf32>
    %c7 = arith.constant 7 : index
    %c0_16 = arith.constant 0 : index
    %50 = vector.load %arg6[%c7, %c0_16] : memref<8x128xf32, #tpu.memory_space<vmem>>, vector<1x128xf32>
    tpu.vector_store %arg6[%c7, %c0_16], %49 {strides = array<i32>} : memref<8x128xf32, #tpu.memory_space<vmem>>, vector<1x128xf32>,
    %c0_17 = arith.constant 0 : index
    %c0_18 = arith.constant 0 : index
    %51 = vector.load %arg6[%c0_17, %c0_18] : memref<8x128xf32, #tpu.memory_space<vmem>>, vector<8x128xf32>
    %c0_19 = arith.constant 0 : index
    %c0_20 = arith.constant 0 : index
    %52 = vector.load %arg4[%c0_19, %c0_20] : memref<8x128xf32, #tpu.memory_space<vmem>>, vector<8x128xf32>
    %53 = arith.addf %51, %52 : vector<8x128xf32>
    %c0_21 = arith.constant 0 : index
    %c0_22 = arith.constant 0 : index
    %c0_23 = arith.constant 0 : index
    %54 = vector.load %arg5[%c0_21, %c0_22, %c0_23] : memref<1x8x128xf32, #tpu.memory_space<vmem>>, vector<1x8x128xf32>
    %55 = vector.shape_cast %54 : vector<1x8x128xf32> to vector<8x128xf32>
    %56 = vector.shape_cast %53 : vector<8x128xf32> to vector<1x8x128xf32>
    tpu.vector_store %arg5[%c0_21, %c0_22, %c0_23], %56 {strides = array<i32>} : memref<1x8x128xf32, #tpu.memory_space<vmem>>, vector<1x8x128xf32>,
    return
  }
  func.func @transform_0(%arg0: i32, %arg1: i32, %arg2: memref<16xi32, #tpu.memory_space<smem>>) -> (i32, i32) {
    %c0_i32 = arith.constant 0 : i32
    %c0_i32_0 = arith.constant 0 : i32
    %c0_i32_1 = arith.constant 0 : i32
    return %c0_i32, %c0_i32_0 : i32, i32
  }
  func.func @transform_1(%arg0: i32, %arg1: i32, %arg2: memref<16xi32, #tpu.memory_space<smem>>) -> (i32, i32) {
    %c0_i32 = arith.constant 0 : i32
    %c0_i32_0 = arith.constant 0 : i32
    return %arg0, %c0_i32 : i32, i32
  }
  func.func @transform_2(%arg0: i32, %arg1: i32, %arg2: memref<16xi32, #tpu.memory_space<smem>>) -> (i32, i32, i32) {
    %c0_i32 = arith.constant 0 : i32
    %c0_i32_0 = arith.constant 0 : i32
    return %arg1, %arg0, %c0_i32 : i32, i32, i32
  }
}

</mosaic_0001>

<llo_original>
// kernel: tpu_custom_call.1
$region0: #{tpu_custom_call.1}
  #allocation0 [shape = 'u32[]', space=smem, size = 0x4, offset = 0x4, fixed_abs, tag = 'smem constant byte address 0x4 - core index']
  #allocation1 [shape = 'u32[144,128]{1,0:T(1,128)}', space=vmem, size = 0x12000, scoped, tag = 'internal scratch']
  #allocation2 [shape = 'f32[8,128]{1,0:T(8,128)}', space=vmem, size = 0x1000, scoped, tag = 'scratch operand']
  #allocation3 [shape = 's32[1]{0}', space=sflag, size = 0x4, scoped, tag = 'scoped memory for tpu_custom_call.1']
  #allocation4 [shape = 'u8[512]{0}', space=smem, size = 0x200, scoped, tag = 'prefetched SMEM operand 0']
  %s0 = inlined_call_operand.hbm [shape: s32[16], index: 0, kind: input, shape index: {}]
  %s1 = inlined_call_operand.hbm [shape: f32[32,128], index: 1, kind: input, shape index: {}]
  %s2 = inlined_call_operand.hbm [shape: f32[8,128], index: 2, kind: input, shape index: {}]
  %s3 = inlined_call_operand.hbm [shape: f32[2,8,128], index: 3, kind: output, shape index: {}]
  %s4 = sld [smem:[#allocation0]]
  $region49: #{tpu_custom_call.1} parent=0
    _
  %s6 = ssub.s32 1, %s4
  %s7 = scalar_select 0, %s6, %s4
  %9 = dma.hbm_to_smem %s0, 16, [#allocation4], [#allocation3]
  %10 = dma.done [#allocation3], 16
  %11 = sfence
  $region1: #{tpu_custom_call.1} parent=0
    #allocation5 [shape = 'u8[16384]{0}', space=vmem, size = 0x4000, scoped, tag = 'input window, operand 1, single buffered']
    #allocation6 [shape = 's32[2]{0}', space=sflag, size = 0x8, scoped, tag = 'scoped memory for tpu_custom_call.1']
    #allocation7 [shape = 's32[2]{0}', space=sflag, size = 0x8, scoped, tag = 'scoped memory for tpu_custom_call.1']
    #allocation8 [shape = 'u8[4096]{0}', space=vmem, size = 0x1000, scoped, tag = 'input window, operand 2, single buffered']
    #allocation9 [shape = 's32[1]{0}', space=sflag, size = 0x4, scoped, tag = 'scoped memory for tpu_custom_call.1']
    #allocation10 [shape = 'u8[8192]{0}', space=vmem, size = 0x2000, scoped, tag = 'output window, operand 0']
    %12 = vsyncpa [#allocation6], 0
    %13 = vsyncpa [#allocation9], 0
    %14 = vsyncpa [#allocation7], 0
    %s15 = scalar_lea.sflag [#allocation7], 1
    %16 = vsyncpa %s15, 0
    loop: start=0, step=1, limit=4
    $region2: #{tpu_custom_call.1} parent=1 // loop_pre_header
      _
    $region3: #{tpu_custom_call.1} parent=1 // loop_header
      %s18 = sphi 0, %s22
      %p19 = scmp.ge.s32.totalorder %s18, 4
      %s25 = sphi 0, %s37
      %s26 = sphi 0, %s33
      %s27 = sphi 0, %s25
      %s28 = sphi 0, %s26
      %s29 = sphi 0, %s27
      %s30 = sphi 0, %s28
      %s38 = sphi 0, %s38
      %s40 = sphi 0, %s38
      %s41 = sphi 0, %s40
      %s55 = sphi 0, %s41
      %s61 = sphi 0, %s63
      %s64 = sphi 0, %s61
      %s65 = sphi 0, %s64
      %s81 = sphi 0, %s65
      %s89 = sphi 0, %s91
      %s92 = sphi 0, %s89
      %s93 = sphi 0, %s92
      %s109 = sphi 0, %s93
    $region4: #{tpu_custom_call.1} parent=1 // loop_header_branch
      %21 = sbr.rel (%p19) target = $region8
    $region5: #{tpu_custom_call.1} parent=1 // loop_body
      %s23 = ssub.s32 %s18, 1
      %s24 = ssub.s32 %s18, 2
      %s31 = sadd.s32 1, %s26
      %p32 = scmp.ge.s32.totalorder %s31, 2
      %s33 = scalar_select %p32, 0, %s31
      %s34 = sadd.s32 1, %s25
      %s35 = scalar_select %p32, %s34, %s25
      %p36 = scmp.ge.s32.totalorder %s35, 1
      %s37 = scalar_select %p36, 0, %s35
      %s39 = sadd.s32 %s38, 1
      %p42 = scmp.eq.s32.totalorder %s18, 1
      %p43 = scmp.ne.s32.totalorder %s38, %s40
      %p44 = scmp.eq.s32.totalorder %s18, 0
      %p45 = por %p43, %p44
      %p46 = scmp.ne.s32.totalorder %s38, %s40
      %p47 = scmp.eq.s32.totalorder %s23, 1
      %p48 = por %p46, %p47
      %p49 = scmp.ne.s32.totalorder %s40, %s41
      %p50 = scmp.eq.s32.totalorder %s23, 0
      %p51 = por %p49, %p50
      %p52 = scmp.ne.s32.totalorder %s40, %s41
      %p53 = scmp.eq.s32.totalorder %s24, 1
      %p54 = por %p52, %p53
      %p56 = scmp.ne.s32.totalorder %s41, %s55
      %p57 = scmp.eq.s32.totalorder %s24, 0
      %p58 = por %p56, %p57
      %s59 = ssub.s32 %s25, %s37
      %p60 = scmp.eq.s32.totalorder %s59, 0
      %s62 = sadd.s32 %s61, 1
      %s63 = scalar_select %p60, %s61, %s62
      %p66 = pneg %p60
      %p67 = scmp.eq.s32.totalorder %s18, 1
      %p68 = por %p66, %p67
      %p69 = scmp.ne.s32.totalorder %s61, %s64
      %p70 = scmp.eq.s32.totalorder %s18, 0
      %p71 = por %p69, %p70
      %p72 = scmp.ne.s32.totalorder %s61, %s64
      %p73 = scmp.eq.s32.totalorder %s23, 1
      %p74 = por %p72, %p73
      %p75 = scmp.ne.s32.totalorder %s64, %s65
      %p76 = scmp.eq.s32.totalorder %s23, 0
      %p77 = por %p75, %p76
      %p78 = scmp.ne.s32.totalorder %s64, %s65
      %p79 = scmp.eq.s32.totalorder %s24, 1
      %p80 = por %p78, %p79
      %p82 = scmp.ne.s32.totalorder %s65, %s81
      %p83 = scmp.eq.s32.totalorder %s24, 0
      %p84 = por %p82, %p83
      %s85 = ssub.s32 %s26, %s33
      %s86 = ssub.s32 %s25, %s37
      %s87 = sor.u32 %s85, %s86
      %p88 = scmp.eq.s32.totalorder %s87, 0
      %s90 = sadd.s32 %s89, 1
      %s91 = scalar_select %p88, %s89, %s90
      %p94 = pneg %p88
      %p95 = scmp.eq.s32.totalorder %s18, 1
      %p96 = por %p94, %p95
      %p97 = scmp.ne.s32.totalorder %s89, %s92
      %p98 = scmp.eq.s32.totalorder %s18, 0
      %p99 = por %p97, %p98
      %p100 = scmp.ne.s32.totalorder %s89, %s92
      %p101 = scmp.eq.s32.totalorder %s23, 1
      %p102 = por %p100, %p101
      %p103 = scmp.ne.s32.totalorder %s92, %s93
      %p104 = scmp.eq.s32.totalorder %s23, 0
      %p105 = por %p103, %p104
      %p106 = scmp.ne.s32.totalorder %s92, %s93
      %p107 = scmp.eq.s32.totalorder %s24, 1
      %p108 = por %p106, %p107
      %p110 = scmp.ne.s32.totalorder %s93, %s109
      %p111 = scmp.eq.s32.totalorder %s24, 0
      %p112 = por %p110, %p111
      %p113 = scmp.le.s32.totalorder 1, %s18
      %p114 = scmp.lt.s32.totalorder %s18, 3
      %p115 = pnand %p113, %p114
      %p116 = pneg %p115
      // Predicated region
      $region9: #{tpu_custom_call.1} parent=5 // pred_check
        _
      $region10: #{tpu_custom_call.1} parent=5 // pred_check_branch
        %118 = sbr.rel (%p115) target = $region12
      $region11: #{tpu_custom_call.1} parent=5 // pred_region
        %s119 = ssub.s32 %s18, 1
        // Predicated region
        $region13: #{tpu_custom_call.1} parent=11 // pred_check
          %p120 = pneg %p51
        $region14: #{tpu_custom_call.1} parent=11 // pred_check_branch
          %122 = sbr.rel (%p120) target = $region16
        $region15: #{tpu_custom_call.1} parent=11 // pred_region
          %s124 = ssub.s32 512, 512
          %125 = vsyncadd [#allocation6], %s124
          %s126 = sshll.u32 [#allocation5], 4
          %s127 = int_to_ptr.vmem [resolvable:$true] %s126
          %132 = dma.hbm_to_vmem [thread:$0]  %s1, 512, %s127, [#allocation6], 128, 128, 8
        $region16: #{tpu_custom_call.1} parent=11 // pred_fallthru
          _
        // Predicated region
        $region17: #{tpu_custom_call.1} parent=11 // pred_check
          %p133 = pneg %p77
        $region18: #{tpu_custom_call.1} parent=11 // pred_check_branch
          %135 = sbr.rel (%p133) target = $region20
        $region19: #{tpu_custom_call.1} parent=11 // pred_region
          %s137 = ssub.s32 128, 128
          %138 = vsyncadd [#allocation9], %s137
          %s139 = smul.addr %s27, 128
          %s140 = scalar_lea.hbm %s2, %s139
          %s142 = sshll.u32 [#allocation8], 4
          %s143 = int_to_ptr.vmem [resolvable:$true] %s142
          %145 = dma.hbm_to_vmem [thread:$0]  %s140, 128, %s143, [#allocation9]
        $region20: #{tpu_custom_call.1} parent=11 // pred_fallthru
          _
      $region12: #{tpu_custom_call.1} parent=5 // pred_fallthru
        _
      %p146 = scmp.lt.s32.totalorder %s18, 2
      // Predicated region
      $region21: #{tpu_custom_call.1} parent=5 // pred_check
        %p147 = pneg %p146
      $region22: #{tpu_custom_call.1} parent=5 // pred_check_branch
        %149 = sbr.rel (%p147) target = $region24
      $region23: #{tpu_custom_call.1} parent=5 // pred_region
        _
      $region24: #{tpu_custom_call.1} parent=5 // pred_fallthru
        _
      %p150 = scmp.le.s32.totalorder 1, %s18
      %p151 = scmp.lt.s32.totalorder %s18, 3
      %p152 = pnand %p150, %p151
      %p153 = pneg %p152
      // Predicated region
      $region25: #{tpu_custom_call.1} parent=5 // pred_check
        _
      $region26: #{tpu_custom_call.1} parent=5 // pred_check_branch
        %155 = sbr.rel (%p152) target = $region28
      $region27: #{tpu_custom_call.1} parent=5 // pred_region
        %s156 = ssub.s32 %s18, 1
        // Predicated region
        $region29: #{tpu_custom_call.1} parent=27 // pred_check
          %p157 = pneg %p51
        $region30: #{tpu_custom_call.1} parent=27 // pred_check_branch
          %159 = sbr.rel (%p157) target = $region32
        $region31: #{tpu_custom_call.1} parent=27 // pred_region
          %160 = dma.done [#allocation6], 512
        $region32: #{tpu_custom_call.1} parent=27 // pred_fallthru
          _
        // Predicated region
        $region33: #{tpu_custom_call.1} parent=27 // pred_check
          %p161 = pneg %p77
        $region34: #{tpu_custom_call.1} parent=27 // pred_check_branch
          %163 = sbr.rel (%p161) target = $region36
        $region35: #{tpu_custom_call.1} parent=27 // pred_region
          %164 = dma.done [#allocation9], 128
        $region36: #{tpu_custom_call.1} parent=27 // pred_fallthru
          _
        %p165 = pneg %p51
        %p166 = pneg %p48
        %p167 = pneg %p77
        %p168 = pneg %p74
        %p169 = pneg %p105
        %p170 = pneg %p102
        %s171 = sand.u32 %s92, 1
        %s172 = scalar_lea.sflag [#allocation7], %s171
        %s173 = sand.u32 %s92, 1
        %s174 = smul.addr %s173, 8
        %s175 = scalar_lea.vmem [#allocation10], %s174
        %s176 = smul.u32 %s28, 8
        %s177 = smul.u32 %s27, 8
        %s178 = sadd.s32 %s176, %s177
        %s179 = sld [smem:[#allocation4 + %s178]]
        %s180 = scalar_lea.vmem [#allocation5], %s179
        %v181 = vld [vmem:[%s180] sm:$0x1]
        %182 = vst [vmem:[#allocation2] sm:$0x1] %v181
        %s183 = sadd.s32 %s178, 1
        %s184 = sld [smem:[#allocation4 + %s183]]
        %s185 = scalar_lea.vmem [#allocation5], %s184
        %v186 = vld [vmem:[%s185] sm:$0x1]
        %187 = vst [vmem:[#allocation2 + $0x1] sm:$0x1] %v186
        %s188 = sadd.s32 %s178, 2
        %s189 = sld [smem:[#allocation4 + %s188]]
        %s190 = scalar_lea.vmem [#allocation5], %s189
        %v191 = vld [vmem:[%s190] sm:$0x1]
        %192 = vst [vmem:[#allocation2 + $0x2] sm:$0x1] %v191
        %s193 = sadd.s32 %s178, 3
        %s194 = sld [smem:[#allocation4 + %s193]]
        %s195 = scalar_lea.vmem [#allocation5], %s194
        %v196 = vld [vmem:[%s195] sm:$0x1]
        %197 = vst [vmem:[#allocation2 + $0x3] sm:$0x1] %v196
        %s198 = sadd.s32 %s178, 4
        %s199 = sld [smem:[#allocation4 + %s198]]
        %s200 = scalar_lea.vmem [#allocation5], %s199
        %v201 = vld [vmem:[%s200] sm:$0x1]
        %202 = vst [vmem:[#allocation2 + $0x4] sm:$0x1] %v201
        %s203 = sadd.s32 %s178, 5
        %s204 = sld [smem:[#allocation4 + %s203]]
        %s205 = scalar_lea.vmem [#allocation5], %s204
        %v206 = vld [vmem:[%s205] sm:$0x1]
        %207 = vst [vmem:[#allocation2 + $0x5] sm:$0x1] %v206
        %s208 = sadd.s32 %s178, 6
        %s209 = sld [smem:[#allocation4 + %s208]]
        %s210 = scalar_lea.vmem [#allocation5], %s209
        %v211 = vld [vmem:[%s210] sm:$0x1]
        %212 = vst [vmem:[#allocation2 + $0x6] sm:$0x1] %v211
        %s213 = sadd.s32 %s178, 7
        %s214 = sld [smem:[#allocation4 + %s213]]
        %s215 = scalar_lea.vmem [#allocation5], %s214
        %v216 = vld [vmem:[%s215] sm:$0x1]
        %217 = vst [vmem:[#allocation2 + $0x7] sm:$0x1] %v216
        %v218 = vld [vmem:[#allocation2] sm:$0xff]
        %v219 = vld [vmem:[#allocation8] sm:$0xff]
        %v220 = vadd.f32 %v218, %v219
        %221 = vst [vmem:[%s175] sm:$0xff] %v220
        %s222 = sand.u32 %s92, 1
        %s223 = scalar_lea.sflag [#allocation7], %s222
        %s224 = sand.u32 %s92, 1
        %s225 = smul.addr %s224, 8
        %s226 = scalar_lea.vmem [#allocation10], %s225
        // Predicated region
        $region37: #{tpu_custom_call.1} parent=27 // pred_check
          %p227 = pneg %p102
        $region38: #{tpu_custom_call.1} parent=27 // pred_check_branch
          %229 = sbr.rel (%p227) target = $region40
        $region39: #{tpu_custom_call.1} parent=27 // pred_region
          %s231 = ssub.s32 128, 128
          %232 = vsyncadd %s223, %s231
          %s233 = sadd.s32 %s27, %s28
          %s234 = smul.addr %s233, 128
          %s235 = scalar_lea.hbm %s3, %s234
          %s237 = sshll.u32 %s226, 4
          %s238 = int_to_ptr.vmem [resolvable:$true] %s237
          %240 = dma.vmem_to_hbm [thread:$0]  %s238, 128, %s235, %s223
        $region40: #{tpu_custom_call.1} parent=27 // pred_fallthru
          _
      $region28: #{tpu_custom_call.1} parent=5 // pred_fallthru
        _
      %p241 = scmp.le.s32.totalorder 2, %s18
      // Predicated region
      $region41: #{tpu_custom_call.1} parent=5 // pred_check
        %p242 = pneg %p241
      $region42: #{tpu_custom_call.1} parent=5 // pred_check_branch
        %244 = sbr.rel (%p242) target = $region44
      $region43: #{tpu_custom_call.1} parent=5 // pred_region
        %s245 = ssub.s32 %s18, 2
        // Predicated region
        $region45: #{tpu_custom_call.1} parent=43 // pred_check
          %p246 = pneg %p108
        $region46: #{tpu_custom_call.1} parent=43 // pred_check_branch
          %248 = sbr.rel (%p246) target = $region48
        $region47: #{tpu_custom_call.1} parent=43 // pred_region
          %s249 = sand.u32 %s93, 1
          %s250 = scalar_lea.sflag [#allocation7], %s249
          %s251 = sand.u32 %s93, 1
          %s252 = smul.addr %s251, 8
          %s253 = scalar_lea.vmem [#allocation10], %s252
          %254 = dma.done %s250, 128
        $region48: #{tpu_custom_call.1} parent=43 // pred_fallthru
          _
      $region44: #{tpu_custom_call.1} parent=5 // pred_fallthru
        _
    $region6: #{tpu_custom_call.1} parent=1 // loop_footer
      %s22 = sadd.s32 1, %s18
    $region7: #{tpu_custom_call.1} parent=1 // loop_footer_branch
      %17 = sbr.rel target = $region3
    $region8: #{tpu_custom_call.1} parent=1 // loop_exit
      _
    %255 = vsyncpa [#allocation6], 1
    %s256 = scalar_lea.sflag [#allocation6], 1
    %257 = vsyncpa %s256, 1
    %258 = vsyncpa [#allocation9], 1
    %259 = vsyncpa [#allocation7], 1
    %s260 = scalar_lea.sflag [#allocation7], 1
    %261 = vsyncpa %s260, 1

</llo_original>
